<compile_context>
chip_gen: v7x
topology: tpu7x:2x2x1
jax: 0.10.0
libtpu: 0.0.40
codegen_flags: <defaults>
</compile_context>

<pallas_src>
import functools

import jax
import jax.numpy as jnp
from jax.experimental import pallas as pl
from jax.experimental.pallas import tpu as pltpu


def _round_up(x, m):
    return (x + m - 1) // m * m


# -----------------------------------------------------------------------------
# Shared helper: y (C_out, M_b) = sum_{kh,kw} W[kh,kw] (C_out, C_in_p) @ x_shift.
# xbuf_ref holds one batch's row-padded image flattened with row stride `wb`
# (plus `pad` front zeros), so every tap is a pure static lane shift.  Only taps
# whose window crosses the left/right edge pay a select against `colid2`.
# -----------------------------------------------------------------------------
def _conv_taps(xbuf_ref, w_ref, colid2, *, k_size, pad, dil, w_in, wb, m_b):
    c_out = w_ref.shape[1]
    acc = jnp.zeros((c_out, m_b), jnp.float32)
    for kh in range(k_size):
        for kw in range(k_size):
            start = kh * dil * wb + kw * dil                 # static lane offset
            xs = xbuf_ref[0, :, start:start + m_b]           # (C_in_p, M_b) bf16
            lo = pad - kw * dil                              # valid output-col range
            hi = w_in + pad - kw * dil
            if lo > 0 or hi < wb:                            # edge taps only
                valid = jnp.logical_and(colid2 >= lo, colid2 < hi)
                xs = jnp.where(valid, xs, jnp.zeros_like(xs))
            acc = acc + jnp.dot(w_ref[kh * k_size + kw], xs,
                                preferred_element_type=jnp.float32)
    return acc


# -----------------------------------------------------------------------------
# Fused path: conv + in-kernel BN (batch stats) + LeakyReLU, single writeback.
# -----------------------------------------------------------------------------
def _fused_kernel(colid_ref, xbuf_ref, w_ref, g_ref, b_ref, out_ref, *,
                  k_size, pad, dil, w_in, wb, w_out, m_valid, eps, slope):
    i = pl.program_id(0)
    m_b = out_ref.shape[2]
    colid2 = colid_ref[0]                                    # (1, M_b) int32

    # Per-batch conv result parked in the VMEM-resident output block.
    out_ref[i] = _conv_taps(xbuf_ref, w_ref, colid2, k_size=k_size, pad=pad,
                            dil=dil, w_in=w_in, wb=wb, m_b=m_b)

    # Last batch: whole pre-BN output is resident -> finalize in-kernel.
    @pl.when(i == pl.num_programs(0) - 1)
    def _():
        y = out_ref[...]                                     # (N, C_out, M_b) f32
        if w_out < wb:                                       # exclude over-computed cols
            vmask = colid_ref[...] < w_out                   # (1, 1, M_b)
            yv = jnp.where(vmask, y, 0.0)
        else:
            yv = y
        inv_m = 1.0 / m_valid
        mean = jnp.sum(jnp.sum(yv, axis=2, keepdims=True),
                       axis=0, keepdims=True) * inv_m        # (1, C_out, 1)
        d = yv - mean                                        # centered second moment
        if w_out < wb:
            d = jnp.where(vmask, d, 0.0)
        var = jnp.sum(jnp.sum(d * d, axis=2, keepdims=True),
                      axis=0, keepdims=True) * inv_m
        a = g_ref[...] * jax.lax.rsqrt(var + eps)            # (1, C_out, 1)
        c = b_ref[...] - a * mean
        z = y * a + c
        out_ref[...] = jnp.where(z >= 0, z, slope * z)       # LeakyReLU(0.01)


# -----------------------------------------------------------------------------
# Fallback two-pass path (only used when the fused output would not fit VMEM).
# -----------------------------------------------------------------------------
def _conv_stats_kernel(colid_ref, xbuf_ref, w_ref, y_ref, sum_ref, sq_ref, *,
                       k_size, pad, dil, w_in, wb, w_out):
    i = pl.program_id(0)
    m_b = y_ref.shape[2]
    colid2 = colid_ref[0]

    @pl.when(i == 0)
    def _():
        sum_ref[...] = jnp.zeros_like(sum_ref)
        sq_ref[...] = jnp.zeros_like(sq_ref)

    acc = _conv_taps(xbuf_ref, w_ref, colid2, k_size=k_size, pad=pad, dil=dil,
                     w_in=w_in, wb=wb, m_b=m_b)
    accv = jnp.where(colid2 < w_out, acc, 0.0) if w_out < wb else acc
    sum_ref[...] += jnp.sum(accv, axis=1, keepdims=True)
    sq_ref[...] += jnp.sum(accv * accv, axis=1, keepdims=True)
    y_ref[0] = acc.astype(y_ref.dtype)                       # bf16 intermediate


def _affine_lrelu_kernel(y_ref, a_ref, c_ref, o_ref, *, slope):
    z = y_ref[...].astype(jnp.float32) * a_ref[...] + c_ref[...]
    o_ref[...] = jnp.where(z >= 0, z, slope * z)


# -----------------------------------------------------------------------------
# Wrapper.
# -----------------------------------------------------------------------------
def conv_block(x, weight, bias, gamma, beta, *, k_size, pad, dil, eps=1e-5,
               negative_slope=0.01):
    """x: (N, C_in, H, W); weight: (C_out, C_in, k, k) (PyTorch layouts); stride=1.

    The Conv2d bias cancels exactly under training-mode BatchNorm (it only
    shifts the batch mean), so it is accepted but not used in the computation.
    """
    del bias
    n, c_in, h, w = x.shape
    c_out = weight.shape[0]
    h_out = h + 2 * pad - dil * (k_size - 1)
    w_out = w + 2 * pad - dil * (k_size - 1)
    assert h_out > 0 and w_out > 0

    # Flat-shift geometry: pad rows vertically, flatten with row stride
    # wb = max(W, W_out); every conv tap becomes a pure lane shift of the slab.
    wb = max(w, w_out)
    hv = h + 2 * pad
    m_b = h_out * wb                       # per-batch lane (M) extent
    c_in_p = _round_up(c_in, 8)
    kk = k_size * k_size

    lbuf = _round_up(max(pad + hv * wb, hv * wb + (k_size - 1) * dil), 128)
    xb = x.astype(jnp.bfloat16)            # bf16 operands, f32 accumulation
    xb = jnp.pad(xb, ((0, 0), (0, 0), (pad, pad), (0, wb - w)))
    xb = xb.reshape(n, c_in, hv * wb)
    xb = jnp.pad(xb, ((0, 0), (0, c_in_p - c_in), (pad, lbuf - pad - hv * wb)))

    wt = jnp.pad(weight.astype(jnp.bfloat16),
                 ((0, 0), (0, c_in_p - c_in), (0, 0), (0, 0)))
    wt = wt.transpose(2, 3, 0, 1).reshape(kk, c_out, c_in_p)   # (k*k, C_out, C_in_p)

    colid = (jnp.arange(m_b, dtype=jnp.int32) % wb).reshape(1, 1, m_b)
    g3 = gamma.astype(jnp.float32).reshape(1, c_out, 1)
    b3 = beta.astype(jnp.float32).reshape(1, c_out, 1)

    m_valid = float(n * h_out * w_out)
    flops = 2 * n * m_b * c_in_p * c_out * kk
    out_bytes = n * c_out * m_b * 4

    # Rough VMEM footprint of the fused path (resident output + finalize temps +
    # double-buffered x slab + weights).  Kept well under v7x's 64 MiB physical
    # and all generations' default scoped limits.
    fused_vmem = 6 * out_bytes + 2 * (c_in_p * lbuf * 2) + wt.size * 2

    if fused_vmem <= 12 * 1024 * 1024:
        kernel = functools.partial(
            _fused_kernel, k_size=k_size, pad=pad, dil=dil, w_in=w, wb=wb,
            w_out=w_out, m_valid=m_valid, eps=eps, slope=negative_slope)
        out_flat = pl.pallas_call(
            kernel,
            grid=(n,),
            in_specs=[
                pl.BlockSpec((1, 1, m_b), lambda i: (0, 0, 0)),          # col ids
                pl.BlockSpec((1, c_in_p, lbuf), lambda i: (i, 0, 0)),    # x slab
                pl.BlockSpec((kk, c_out, c_in_p), lambda i: (0, 0, 0)),  # weights
                pl.BlockSpec((1, c_out, 1), lambda i: (0, 0, 0)),        # gamma
                pl.BlockSpec((1, c_out, 1), lambda i: (0, 0, 0)),        # beta
            ],
            out_specs=pl.BlockSpec((n, c_out, m_b), lambda i: (0, 0, 0)),
            out_shape=jax.ShapeDtypeStruct((n, c_out, m_b), jnp.float32),
            compiler_params=pltpu.CompilerParams(
                dimension_semantics=("arbitrary",)),
            cost_estimate=pl.CostEstimate(
                flops=flops, transcendentals=c_out,
                bytes_accessed=xb.size * 2 + wt.size * 2 + out_bytes),
        )(colid, xb, wt, g3, b3)
    else:
        # Two-pass fallback: conv + resident per-channel sum/sumsq, host-folded
        # BN affine, then affine + LeakyReLU over lane-dense tiles.
        kernel1 = functools.partial(
            _conv_stats_kernel, k_size=k_size, pad=pad, dil=dil, w_in=w, wb=wb,
            w_out=w_out)
        y_flat, ssum, ssq = pl.pallas_call(
            kernel1,
            grid=(n,),
            in_specs=[
                pl.BlockSpec((1, 1, m_b), lambda i: (0, 0, 0)),
                pl.BlockSpec((1, c_in_p, lbuf), lambda i: (i, 0, 0)),
                pl.BlockSpec((kk, c_out, c_in_p), lambda i: (0, 0, 0)),
            ],
            out_specs=[
                pl.BlockSpec((1, c_out, m_b), lambda i: (i, 0, 0)),   # bf16 y
                pl.BlockSpec((c_out, 1), lambda i: (0, 0)),           # resident sum
                pl.BlockSpec((c_out, 1), lambda i: (0, 0)),           # resident sumsq
            ],
            out_shape=[
                jax.ShapeDtypeStruct((n, c_out, m_b), jnp.bfloat16),
                jax.ShapeDtypeStruct((c_out, 1), jnp.float32),
                jax.ShapeDtypeStruct((c_out, 1), jnp.float32),
            ],
            compiler_params=pltpu.CompilerParams(
                dimension_semantics=("arbitrary",)),
            cost_estimate=pl.CostEstimate(
                flops=flops, transcendentals=0,
                bytes_accessed=xb.size * 2 + wt.size * 2 + n * c_out * m_b * 2),
        )(colid, xb, wt)

        mean = ssum / m_valid                                  # (C_out, 1)
        var = jnp.maximum(ssq / m_valid - mean * mean, 0.0)
        a3 = (gamma.astype(jnp.float32).reshape(c_out, 1)
              * jax.lax.rsqrt(var + eps)).reshape(1, c_out, 1)
        c3 = b3 - a3 * mean.reshape(1, c_out, 1)

        out_flat = pl.pallas_call(
            functools.partial(_affine_lrelu_kernel, slope=negative_slope),
            grid=(n,),
            in_specs=[
                pl.BlockSpec((1, c_out, m_b), lambda i: (i, 0, 0)),
                pl.BlockSpec((1, c_out, 1), lambda i: (0, 0, 0)),
                pl.BlockSpec((1, c_out, 1), lambda i: (0, 0, 0)),
            ],
            out_specs=pl.BlockSpec((1, c_out, m_b), lambda i: (i, 0, 0)),
            out_shape=jax.ShapeDtypeStruct((n, c_out, m_b), jnp.float32),
            compiler_params=pltpu.CompilerParams(
                dimension_semantics=("parallel",)),
        )(y_flat, a3, c3)

    # (N, C_out, H_out*wb) -> NCHW.  For the usual "same" conv (wb == W_out)
    # this is a free contiguous reshape; otherwise slice off extra columns.
    out = out_flat.reshape(n, c_out, h_out, wb)
    if wb != w_out:
        out = out[:, :, :, :w_out]
    return out


if __name__ == "__main__":
    # ConvBlock(in_ch=4, out_ch=8, k_size=3, pad=1, dil=1)
    N, C_IN, H, W = 2, 4, 16, 16
    C_OUT, K, PAD, DIL = 8, 3, 1, 1

    key = jax.random.PRNGKey(0)
    kx, kw_, kb = jax.random.split(key, 3)
    x = jax.random.normal(kx, (N, C_IN, H, W), dtype=jnp.float32)
    weight = jax.random.normal(kw_, (C_OUT, C_IN, K, K), dtype=jnp.float32) * 0.1
    bias = jax.random.normal(kb, (C_OUT,), dtype=jnp.float32) * 0.1
    gamma = jnp.ones((C_OUT,), dtype=jnp.float32)   # BN weight (PyTorch default)
    beta = jnp.zeros((C_OUT,), dtype=jnp.float32)   # BN bias (PyTorch default)

    y = conv_block(x, weight, bias, gamma, beta, k_size=K, pad=PAD, dil=DIL)
    y = jax.block_until_ready(y)
    assert y.shape == (N, C_OUT, H, W), y.shape

    # Reference: f32 XLA conv (+bias) -> training-mode BN (biased var, eps=1e-5)
    # -> LeakyReLU(0.01).
    ref = jax.lax.conv_general_dilated(
        x, weight, window_strides=(1, 1), padding=((PAD, PAD), (PAD, PAD)),
        rhs_dilation=(DIL, DIL),
        dimension_numbers=("NCHW", "OIHW", "NCHW")) + bias.reshape(1, -1, 1, 1)
    mu = ref.mean(axis=(0, 2, 3), keepdims=True)
    vr = ref.var(axis=(0, 2, 3), keepdims=True)
    ref = (gamma.reshape(1, -1, 1, 1) * (ref - mu) * jax.lax.rsqrt(vr + 1e-5)
           + beta.reshape(1, -1, 1, 1))
    ref = jnp.where(ref >= 0, ref, 0.01 * ref)
    err = float(jnp.max(jnp.abs(y - ref)))
    assert err < 5e-2, f"max abs error too large: {err}"

    print("KERNEL_OK")
</pallas_src>

<mosaic_0001>
module attributes {stable_mosaic.version = 11 : i64} {
  func.func @_fused_kernel(%arg0: i32, %arg1: memref<1x1x256xi32, #tpu.memory_space<vmem>>, %arg2: memref<1x8x384xbf16, #tpu.memory_space<vmem>>, %arg3: memref<9x8x8xbf16, #tpu.memory_space<vmem>>, %arg4: memref<1x8x1xf32, #tpu.memory_space<vmem>>, %arg5: memref<1x8x1xf32, #tpu.memory_space<vmem>>, %arg6: memref<2x8x256xf32, #tpu.memory_space<vmem>>) attributes {dimension_semantics = [#tpu.dimension_semantics<arbitrary>], iteration_bounds = array<i64: 2>, scalar_prefetch = 0 : i64, scratch_operands = 0 : i64, tpu.core_type = #tpu.core_type<tc>, window_params = [{pipeline_mode = #tpu.pipeline_mode<synchronous>, transform_indices = @transform_0, window_bounds = array<i64: 1, 1, 256>}, {transform_indices = @transform_1, window_bounds = array<i64: 1, 8, 384>}, {pipeline_mode = #tpu.pipeline_mode<synchronous>, transform_indices = @transform_2, window_bounds = array<i64: 9, 8, 8>}, {pipeline_mode = #tpu.pipeline_mode<synchronous>, transform_indices = @transform_3, window_bounds = array<i64: 1, 8, 1>}, {pipeline_mode = #tpu.pipeline_mode<synchronous>, transform_indices = @transform_4, window_bounds = array<i64: 1, 8, 1>}, {pipeline_mode = #tpu.pipeline_mode<synchronous>, transform_indices = @transform_5, window_bounds = array<i64: 2, 8, 256>}]} {
    %c0 = arith.constant 0 : index
    %c0_0 = arith.constant 0 : index
    %c0_1 = arith.constant 0 : index
    %0 = vector.load %arg1[%c0, %c0_0, %c0_1] : memref<1x1x256xi32, #tpu.memory_space<vmem>>, vector<1x1x256xi32>
    %1 = vector.shape_cast %0 : vector<1x1x256xi32> to vector<1x256xi32>
    %cst = arith.constant 0.000000e+00 : f32
    %2 = vector.broadcast %cst : f32 to vector<8x256xf32>
    %c0_2 = arith.constant 0 : index
    %c0_3 = arith.constant 0 : index
    %c0_4 = arith.constant 0 : index
    %3 = vector.load %arg2[%c0_2, %c0_3, %c0_4] : memref<1x8x384xbf16, #tpu.memory_space<vmem>>, vector<1x8x256xbf16>
    %4 = vector.shape_cast %3 : vector<1x8x256xbf16> to vector<8x256xbf16>
    %c1_i32 = arith.constant 1 : i32
    %5 = vector.broadcast %c1_i32 : i32 to vector<1x256xi32>
    %6 = arith.cmpi sge, %1, %5 : vector<1x256xi32>
    %c17_i32 = arith.constant 17 : i32
    %7 = vector.broadcast %c17_i32 : i32 to vector<1x256xi32>
    %8 = arith.cmpi slt, %1, %7 : vector<1x256xi32>
    %9 = arith.andi %6, %8 : vector<1x256xi1>
    %cst_5 = arith.constant 0.000000e+00 : bf16
    %10 = vector.broadcast %cst_5 : bf16 to vector<8x256xbf16>
    %11 = vector.shape_cast %9 : vector<1x256xi1> to vector<1x256xi1>
    %12 = vector.broadcast %11 : vector<1x256xi1> to vector<8x256xi1>
    %13 = arith.select %12, %4, %10 : vector<8x256xi1>, vector<8x256xbf16>
    %c0_6 = arith.constant 0 : index
    %c0_7 = arith.constant 0 : index
    %c0_8 = arith.constant 0 : index
    %14 = vector.load %arg3[%c0_6, %c0_7, %c0_8] : memref<9x8x8xbf16, #tpu.memory_space<vmem>>, vector<1x8x8xbf16>
    %15 = vector.shape_cast %14 : vector<1x8x8xbf16> to vector<8x8xbf16>
    %cst_9 = arith.constant dense<0.000000e+00> : vector<8x256xf32>
    %16 = tpu.matmul %15, %13, %cst_9 {dimension_numbers = #tpu.dot_dimension_numbers<[1], [0], [0], [1], [0, 0, 1, 1], [], []>} : vector<8x8xbf16>, vector<8x256xbf16>, vector<8x256xf32> -> vector<8x256xf32>
    %17 = arith.addf %2, %16 : vector<8x256xf32>
    %c0_10 = arith.constant 0 : index
    %c0_11 = arith.constant 0 : index
    %c1 = arith.constant 1 : index
    %18 = vector.load %arg2[%c0_10, %c0_11, %c1] : memref<1x8x384xbf16, #tpu.memory_space<vmem>>, vector<1x8x256xbf16>
    %19 = vector.shape_cast %18 : vector<1x8x256xbf16> to vector<8x256xbf16>
    %c1_12 = arith.constant 1 : index
    %c0_13 = arith.constant 0 : index
    %c0_14 = arith.constant 0 : index
    %20 = vector.load %arg3[%c1_12, %c0_13, %c0_14] : memref<9x8x8xbf16, #tpu.memory_space<vmem>>, vector<1x8x8xbf16>
    %21 = vector.shape_cast %20 : vector<1x8x8xbf16> to vector<8x8xbf16>
    %cst_15 = arith.constant dense<0.000000e+00> : vector<8x256xf32>
    %22 = tpu.matmul %21, %19, %cst_15 {dimension_numbers = #tpu.dot_dimension_numbers<[1], [0], [0], [1], [0, 0, 1, 1], [], []>} : vector<8x8xbf16>, vector<8x256xbf16>, vector<8x256xf32> -> vector<8x256xf32>
    %23 = arith.addf %17, %22 : vector<8x256xf32>
    %c0_16 = arith.constant 0 : index
    %c0_17 = arith.constant 0 : index
    %c2 = arith.constant 2 : index
    %24 = vector.load %arg2[%c0_16, %c0_17, %c2] : memref<1x8x384xbf16, #tpu.memory_space<vmem>>, vector<1x8x256xbf16>
    %25 = vector.shape_cast %24 : vector<1x8x256xbf16> to vector<8x256xbf16>
    %c-1_i32 = arith.constant -1 : i32
    %26 = vector.broadcast %c-1_i32 : i32 to vector<1x256xi32>
    %27 = arith.cmpi sge, %1, %26 : vector<1x256xi32>
    %c15_i32 = arith.constant 15 : i32
    %28 = vector.broadcast %c15_i32 : i32 to vector<1x256xi32>
    %29 = arith.cmpi slt, %1, %28 : vector<1x256xi32>
    %30 = arith.andi %27, %29 : vector<1x256xi1>
    %cst_18 = arith.constant 0.000000e+00 : bf16
    %31 = vector.broadcast %cst_18 : bf16 to vector<8x256xbf16>
    %32 = vector.shape_cast %30 : vector<1x256xi1> to vector<1x256xi1>
    %33 = vector.broadcast %32 : vector<1x256xi1> to vector<8x256xi1>
    %34 = arith.select %33, %25, %31 : vector<8x256xi1>, vector<8x256xbf16>
    %c2_19 = arith.constant 2 : index
    %c0_20 = arith.constant 0 : index
    %c0_21 = arith.constant 0 : index
    %35 = vector.load %arg3[%c2_19, %c0_20, %c0_21] : memref<9x8x8xbf16, #tpu.memory_space<vmem>>, vector<1x8x8xbf16>
    %36 = vector.shape_cast %35 : vector<1x8x8xbf16> to vector<8x8xbf16>
    %cst_22 = arith.constant dense<0.000000e+00> : vector<8x256xf32>
    %37 = tpu.matmul %36, %34, %cst_22 {dimension_numbers = #tpu.dot_dimension_numbers<[1], [0], [0], [1], [0, 0, 1, 1], [], []>} : vector<8x8xbf16>, vector<8x256xbf16>, vector<8x256xf32> -> vector<8x256xf32>
    %38 = arith.addf %23, %37 : vector<8x256xf32>
    %c0_23 = arith.constant 0 : index
    %c0_24 = arith.constant 0 : index
    %c16 = arith.constant 16 : index
    %39 = vector.load %arg2[%c0_23, %c0_24, %c16] : memref<1x8x384xbf16, #tpu.memory_space<vmem>>, vector<1x8x256xbf16>
    %40 = vector.shape_cast %39 : vector<1x8x256xbf16> to vector<8x256xbf16>
    %c1_i32_25 = arith.constant 1 : i32
    %41 = vector.broadcast %c1_i32_25 : i32 to vector<1x256xi32>
    %42 = arith.cmpi sge, %1, %41 : vector<1x256xi32>
    %c17_i32_26 = arith.constant 17 : i32
    %43 = vector.broadcast %c17_i32_26 : i32 to vector<1x256xi32>
    %44 = arith.cmpi slt, %1, %43 : vector<1x256xi32>
    %45 = arith.andi %42, %44 : vector<1x256xi1>
    %cst_27 = arith.constant 0.000000e+00 : bf16
    %46 = vector.broadcast %cst_27 : bf16 to vector<8x256xbf16>
    %47 = vector.shape_cast %45 : vector<1x256xi1> to vector<1x256xi1>
    %48 = vector.broadcast %47 : vector<1x256xi1> to vector<8x256xi1>
    %49 = arith.select %48, %40, %46 : vector<8x256xi1>, vector<8x256xbf16>
    %c3 = arith.constant 3 : index
    %c0_28 = arith.constant 0 : index
    %c0_29 = arith.constant 0 : index
    %50 = vector.load %arg3[%c3, %c0_28, %c0_29] : memref<9x8x8xbf16, #tpu.memory_space<vmem>>, vector<1x8x8xbf16>
    %51 = vector.shape_cast %50 : vector<1x8x8xbf16> to vector<8x8xbf16>
    %cst_30 = arith.constant dense<0.000000e+00> : vector<8x256xf32>
    %52 = tpu.matmul %51, %49, %cst_30 {dimension_numbers = #tpu.dot_dimension_numbers<[1], [0], [0], [1], [0, 0, 1, 1], [], []>} : vector<8x8xbf16>, vector<8x256xbf16>, vector<8x256xf32> -> vector<8x256xf32>
    %53 = arith.addf %38, %52 : vector<8x256xf32>
    %c0_31 = arith.constant 0 : index
    %c0_32 = arith.constant 0 : index
    %c17 = arith.constant 17 : index
    %54 = vector.load %arg2[%c0_31, %c0_32, %c17] : memref<1x8x384xbf16, #tpu.memory_space<vmem>>, vector<1x8x256xbf16>
    %55 = vector.shape_cast %54 : vector<1x8x256xbf16> to vector<8x256xbf16>
    %c4 = arith.constant 4 : index
    %c0_33 = arith.constant 0 : index
    %c0_34 = arith.constant 0 : index
    %56 = vector.load %arg3[%c4, %c0_33, %c0_34] : memref<9x8x8xbf16, #tpu.memory_space<vmem>>, vector<1x8x8xbf16>
    %57 = vector.shape_cast %56 : vector<1x8x8xbf16> to vector<8x8xbf16>
    %cst_35 = arith.constant dense<0.000000e+00> : vector<8x256xf32>
    %58 = tpu.matmul %57, %55, %cst_35 {dimension_numbers = #tpu.dot_dimension_numbers<[1], [0], [0], [1], [0, 0, 1, 1], [], []>} : vector<8x8xbf16>, vector<8x256xbf16>, vector<8x256xf32> -> vector<8x256xf32>
    %59 = arith.addf %53, %58 : vector<8x256xf32>
    %c0_36 = arith.constant 0 : index
    %c0_37 = arith.constant 0 : index
    %c18 = arith.constant 18 : index
    %60 = vector.load %arg2[%c0_36, %c0_37, %c18] : memref<1x8x384xbf16, #tpu.memory_space<vmem>>, vector<1x8x256xbf16>
    %61 = vector.shape_cast %60 : vector<1x8x256xbf16> to vector<8x256xbf16>
    %c-1_i32_38 = arith.constant -1 : i32
    %62 = vector.broadcast %c-1_i32_38 : i32 to vector<1x256xi32>
    %63 = arith.cmpi sge, %1, %62 : vector<1x256xi32>
    %c15_i32_39 = arith.constant 15 : i32
    %64 = vector.broadcast %c15_i32_39 : i32 to vector<1x256xi32>
    %65 = arith.cmpi slt, %1, %64 : vector<1x256xi32>
    %66 = arith.andi %63, %65 : vector<1x256xi1>
    %cst_40 = arith.constant 0.000000e+00 : bf16
    %67 = vector.broadcast %cst_40 : bf16 to vector<8x256xbf16>
    %68 = vector.shape_cast %66 : vector<1x256xi1> to vector<1x256xi1>
    %69 = vector.broadcast %68 : vector<1x256xi1> to vector<8x256xi1>
    %70 = arith.select %69, %61, %67 : vector<8x256xi1>, vector<8x256xbf16>
    %c5 = arith.constant 5 : index
    %c0_41 = arith.constant 0 : index
    %c0_42 = arith.constant 0 : index
    %71 = vector.load %arg3[%c5, %c0_41, %c0_42] : memref<9x8x8xbf16, #tpu.memory_space<vmem>>, vector<1x8x8xbf16>
    %72 = vector.shape_cast %71 : vector<1x8x8xbf16> to vector<8x8xbf16>
    %cst_43 = arith.constant dense<0.000000e+00> : vector<8x256xf32>
    %73 = tpu.matmul %72, %70, %cst_43 {dimension_numbers = #tpu.dot_dimension_numbers<[1], [0], [0], [1], [0, 0, 1, 1], [], []>} : vector<8x8xbf16>, vector<8x256xbf16>, vector<8x256xf32> -> vector<8x256xf32>
    %74 = arith.addf %59, %73 : vector<8x256xf32>
    %c0_44 = arith.constant 0 : index
    %c0_45 = arith.constant 0 : index
    %c32 = arith.constant 32 : index
    %75 = vector.load %arg2[%c0_44, %c0_45, %c32] : memref<1x8x384xbf16, #tpu.memory_space<vmem>>, vector<1x8x256xbf16>
    %76 = vector.shape_cast %75 : vector<1x8x256xbf16> to vector<8x256xbf16>
    %c1_i32_46 = arith.constant 1 : i32
    %77 = vector.broadcast %c1_i32_46 : i32 to vector<1x256xi32>
    %78 = arith.cmpi sge, %1, %77 : vector<1x256xi32>
    %c17_i32_47 = arith.constant 17 : i32
    %79 = vector.broadcast %c17_i32_47 : i32 to vector<1x256xi32>
    %80 = arith.cmpi slt, %1, %79 : vector<1x256xi32>
    %81 = arith.andi %78, %80 : vector<1x256xi1>
    %cst_48 = arith.constant 0.000000e+00 : bf16
    %82 = vector.broadcast %cst_48 : bf16 to vector<8x256xbf16>
    %83 = vector.shape_cast %81 : vector<1x256xi1> to vector<1x256xi1>
    %84 = vector.broadcast %83 : vector<1x256xi1> to vector<8x256xi1>
    %85 = arith.select %84, %76, %82 : vector<8x256xi1>, vector<8x256xbf16>
    %c6 = arith.constant 6 : index
    %c0_49 = arith.constant 0 : index
    %c0_50 = arith.constant 0 : index
    %86 = vector.load %arg3[%c6, %c0_49, %c0_50] : memref<9x8x8xbf16, #tpu.memory_space<vmem>>, vector<1x8x8xbf16>
    %87 = vector.shape_cast %86 : vector<1x8x8xbf16> to vector<8x8xbf16>
    %cst_51 = arith.constant dense<0.000000e+00> : vector<8x256xf32>
    %88 = tpu.matmul %87, %85, %cst_51 {dimension_numbers = #tpu.dot_dimension_numbers<[1], [0], [0], [1], [0, 0, 1, 1], [], []>} : vector<8x8xbf16>, vector<8x256xbf16>, vector<8x256xf32> -> vector<8x256xf32>
    %89 = arith.addf %74, %88 : vector<8x256xf32>
    %c0_52 = arith.constant 0 : index
    %c0_53 = arith.constant 0 : index
    %c33 = arith.constant 33 : index
    %90 = vector.load %arg2[%c0_52, %c0_53, %c33] : memref<1x8x384xbf16, #tpu.memory_space<vmem>>, vector<1x8x256xbf16>
    %91 = vector.shape_cast %90 : vector<1x8x256xbf16> to vector<8x256xbf16>
    %c7 = arith.constant 7 : index
    %c0_54 = arith.constant 0 : index
    %c0_55 = arith.constant 0 : index
    %92 = vector.load %arg3[%c7, %c0_54, %c0_55] : memref<9x8x8xbf16, #tpu.memory_space<vmem>>, vector<1x8x8xbf16>
    %93 = vector.shape_cast %92 : vector<1x8x8xbf16> to vector<8x8xbf16>
    %cst_56 = arith.constant dense<0.000000e+00> : vector<8x256xf32>
    %94 = tpu.matmul %93, %91, %cst_56 {dimension_numbers = #tpu.dot_dimension_numbers<[1], [0], [0], [1], [0, 0, 1, 1], [], []>} : vector<8x8xbf16>, vector<8x256xbf16>, vector<8x256xf32> -> vector<8x256xf32>
    %95 = arith.addf %89, %94 : vector<8x256xf32>
    %c0_57 = arith.constant 0 : index
    %c0_58 = arith.constant 0 : index
    %c34 = arith.constant 34 : index
    %96 = vector.load %arg2[%c0_57, %c0_58, %c34] : memref<1x8x384xbf16, #tpu.memory_space<vmem>>, vector<1x8x256xbf16>
    %97 = vector.shape_cast %96 : vector<1x8x256xbf16> to vector<8x256xbf16>
    %c-1_i32_59 = arith.constant -1 : i32
    %98 = vector.broadcast %c-1_i32_59 : i32 to vector<1x256xi32>
    %99 = arith.cmpi sge, %1, %98 : vector<1x256xi32>
    %c15_i32_60 = arith.constant 15 : i32
    %100 = vector.broadcast %c15_i32_60 : i32 to vector<1x256xi32>
    %101 = arith.cmpi slt, %1, %100 : vector<1x256xi32>
    %102 = arith.andi %99, %101 : vector<1x256xi1>
    %cst_61 = arith.constant 0.000000e+00 : bf16
    %103 = vector.broadcast %cst_61 : bf16 to vector<8x256xbf16>
    %104 = vector.shape_cast %102 : vector<1x256xi1> to vector<1x256xi1>
    %105 = vector.broadcast %104 : vector<1x256xi1> to vector<8x256xi1>
    %106 = arith.select %105, %97, %103 : vector<8x256xi1>, vector<8x256xbf16>
    %c8 = arith.constant 8 : index
    %c0_62 = arith.constant 0 : index
    %c0_63 = arith.constant 0 : index
    %107 = vector.load %arg3[%c8, %c0_62, %c0_63] : memref<9x8x8xbf16, #tpu.memory_space<vmem>>, vector<1x8x8xbf16>
    %108 = vector.shape_cast %107 : vector<1x8x8xbf16> to vector<8x8xbf16>
    %cst_64 = arith.constant dense<0.000000e+00> : vector<8x256xf32>
    %109 = tpu.matmul %108, %106, %cst_64 {dimension_numbers = #tpu.dot_dimension_numbers<[1], [0], [0], [1], [0, 0, 1, 1], [], []>} : vector<8x8xbf16>, vector<8x256xbf16>, vector<8x256xf32> -> vector<8x256xf32>
    %110 = arith.addf %95, %109 : vector<8x256xf32>
    %111 = arith.index_cast %arg0 : i32 to index
    %c0_65 = arith.constant 0 : index
    %c0_66 = arith.constant 0 : index
    %112 = vector.load %arg6[%111, %c0_65, %c0_66] : memref<2x8x256xf32, #tpu.memory_space<vmem>>, vector<1x8x256xf32>
    %113 = vector.shape_cast %112 : vector<1x8x256xf32> to vector<8x256xf32>
    %114 = vector.shape_cast %110 : vector<8x256xf32> to vector<1x8x256xf32>
    tpu.vector_store %arg6[%111, %c0_65, %c0_66], %114 {strides = array<i32>} : memref<2x8x256xf32, #tpu.memory_space<vmem>>, vector<1x8x256xf32>,
    %c1_i32_67 = arith.constant 1 : i32
    %115 = arith.cmpi eq, %arg0, %c1_i32_67 : i32
    %116 = arith.extui %115 : i1 to i32
    %c0_i32 = arith.constant 0 : i32
    %117 = arith.cmpi ne, %116, %c0_i32 : i32
    scf.if %117 {
      %c0_68 = arith.constant 0 : index
      %c0_69 = arith.constant 0 : index
      %c0_70 = arith.constant 0 : index
      %118 = vector.load %arg6[%c0_68, %c0_69, %c0_70] : memref<2x8x256xf32, #tpu.memory_space<vmem>>, vector<2x8x256xf32>
      %cst_71 = arith.constant dense<0.000000e+00> : vector<2x8xf32>
      %119 = vector.multi_reduction <add>, %118, %cst_71 [2] : vector<2x8x256xf32> to vector<2x8xf32>
      %120 = vector.shape_cast %119 : vector<2x8xf32> to vector<2x8x1xf32>
      %cst_72 = arith.constant dense<0.000000e+00> : vector<8x1xf32>
      %121 = vector.multi_reduction <add>, %120, %cst_72 [0] : vector<2x8x1xf32> to vector<8x1xf32>
      %122 = vector.shape_cast %121 : vector<8x1xf32> to vector<1x8x1xf32>
      %cst_73 = arith.constant 0.001953125 : f32
      %123 = vector.broadcast %cst_73 : f32 to vector<1x8x1xf32>
      %124 = arith.mulf %122, %123 : vector<1x8x1xf32>
      %125 = vector.broadcast %124 : vector<1x8x1xf32> to vector<2x8x256xf32>
      %126 = arith.subf %118, %125 : vector<2x8x256xf32>
      %127 = arith.mulf %126, %126 : vector<2x8x256xf32>
      %cst_74 = arith.constant dense<0.000000e+00> : vector<2x8xf32>
      %128 = vector.multi_reduction <add>, %127, %cst_74 [2] : vector<2x8x256xf32> to vector<2x8xf32>
      %129 = vector.shape_cast %128 : vector<2x8xf32> to vector<2x8x1xf32>
      %cst_75 = arith.constant dense<0.000000e+00> : vector<8x1xf32>
      %130 = vector.multi_reduction <add>, %129, %cst_75 [0] : vector<2x8x1xf32> to vector<8x1xf32>
      %131 = vector.shape_cast %130 : vector<8x1xf32> to vector<1x8x1xf32>
      %cst_76 = arith.constant 0.001953125 : f32
      %132 = vector.broadcast %cst_76 : f32 to vector<1x8x1xf32>
      %133 = arith.mulf %131, %132 : vector<1x8x1xf32>
      %c0_77 = arith.constant 0 : index
      %c0_78 = arith.constant 0 : index
      %c0_79 = arith.constant 0 : index
      %134 = vector.load %arg4[%c0_77, %c0_78, %c0_79] : memref<1x8x1xf32, #tpu.memory_space<vmem>>, vector<1x8x1xf32>
      %cst_80 = arith.constant 9.99999974E-6 : f32
      %135 = vector.broadcast %cst_80 : f32 to vector<1x8x1xf32>
      %136 = arith.addf %133, %135 : vector<1x8x1xf32>
      %137 = math.rsqrt %136 : vector<1x8x1xf32>
      %138 = arith.mulf %134, %137 : vector<1x8x1xf32>
      %c0_81 = arith.constant 0 : index
      %c0_82 = arith.constant 0 : index
      %c0_83 = arith.constant 0 : index
      %139 = vector.load %arg5[%c0_81, %c0_82, %c0_83] : memref<1x8x1xf32, #tpu.memory_space<vmem>>, vector<1x8x1xf32>
      %140 = arith.mulf %138, %124 : vector<1x8x1xf32>
      %141 = arith.subf %139, %140 : vector<1x8x1xf32>
      %142 = vector.broadcast %138 : vector<1x8x1xf32> to vector<2x8x256xf32>
      %143 = arith.mulf %118, %142 : vector<2x8x256xf32>
      %144 = vector.broadcast %141 : vector<1x8x1xf32> to vector<2x8x256xf32>
      %145 = arith.addf %143, %144 : vector<2x8x256xf32>
      %cst_84 = arith.constant 0.000000e+00 : f32
      %146 = vector.broadcast %cst_84 : f32 to vector<2x8x256xf32>
      %147 = arith.cmpf oge, %145, %146 : vector<2x8x256xf32>
      %cst_85 = arith.constant 0.00999999977 : f32
      %148 = vector.broadcast %cst_85 : f32 to vector<2x8x256xf32>
      %149 = arith.mulf %148, %145 : vector<2x8x256xf32>
      %150 = arith.select %147, %145, %149 : vector<2x8x256xi1>, vector<2x8x256xf32>
      %c0_86 = arith.constant 0 : index
      %c0_87 = arith.constant 0 : index
      %c0_88 = arith.constant 0 : index
      %151 = vector.load %arg6[%c0_86, %c0_87, %c0_88] : memref<2x8x256xf32, #tpu.memory_space<vmem>>, vector<2x8x256xf32>
      tpu.vector_store %arg6[%c0_86, %c0_87, %c0_88], %150 {strides = array<i32>} : memref<2x8x256xf32, #tpu.memory_space<vmem>>, vector<2x8x256xf32>,
    } else {
    }
    return
  }
  func.func @transform_0(%arg0: i32) -> (i32, i32, i32) {
    %c0_i32 = arith.constant 0 : i32
    %c0_i32_0 = arith.constant 0 : i32
    %c0_i32_1 = arith.constant 0 : i32
    %c0_i32_2 = arith.constant 0 : i32
    return %c0_i32, %c0_i32_0, %c0_i32_1 : i32, i32, i32
  }
  func.func @transform_1(%arg0: i32) -> (i32, i32, i32) {
    %c0_i32 = arith.constant 0 : i32
    %c0_i32_0 = arith.constant 0 : i32
    %c0_i32_1 = arith.constant 0 : i32
    return %arg0, %c0_i32, %c0_i32_0 : i32, i32, i32
  }
  func.func @transform_2(%arg0: i32) -> (i32, i32, i32) {
    %c0_i32 = arith.constant 0 : i32
    %c0_i32_0 = arith.constant 0 : i32
    %c0_i32_1 = arith.constant 0 : i32
    %c0_i32_2 = arith.constant 0 : i32
    return %c0_i32, %c0_i32_0, %c0_i32_1 : i32, i32, i32
  }
  func.func @transform_3(%arg0: i32) -> (i32, i32, i32) {
    %c0_i32 = arith.constant 0 : i32
    %c0_i32_0 = arith.constant 0 : i32
    %c0_i32_1 = arith.constant 0 : i32
    %c0_i32_2 = arith.constant 0 : i32
    return %c0_i32, %c0_i32_0, %c0_i32_1 : i32, i32, i32
  }
  func.func @transform_4(%arg0: i32) -> (i32, i32, i32) {
    %c0_i32 = arith.constant 0 : i32
    %c0_i32_0 = arith.constant 0 : i32
    %c0_i32_1 = arith.constant 0 : i32
    %c0_i32_2 = arith.constant 0 : i32
    return %c0_i32, %c0_i32_0, %c0_i32_1 : i32, i32, i32
  }
  func.func @transform_5(%arg0: i32) -> (i32, i32, i32) {
    %c0_i32 = arith.constant 0 : i32
    %c0_i32_0 = arith.constant 0 : i32
    %c0_i32_1 = arith.constant 0 : i32
    %c0_i32_2 = arith.constant 0 : i32
    return %c0_i32, %c0_i32_0, %c0_i32_1 : i32, i32, i32
  }
}

</mosaic_0001>

<llo_original>
// kernel: tpu_custom_call.1
$region0: #{tpu_custom_call.1}
  #allocation0 [shape = 'u32[]', space=smem, size = 0x4, offset = 0x4, fixed_abs, tag = 'smem constant byte address 0x4 - core index']
  #allocation1 [shape = 'u32[144,128]{1,0:T(1,128)}', space=vmem, size = 0x12000, scoped, tag = 'internal scratch']
  %s0 = inlined_call_operand.vmem [shape: s32[1,1,256], index: 0, kind: input, shape index: {}]
  %s1 = inlined_call_operand.vmem [shape: bf16[2,8,384], index: 1, kind: input, shape index: {}]
  %s2 = inlined_call_operand.vmem [shape: bf16[9,8,8], index: 2, kind: input, shape index: {}]
  %s3 = inlined_call_operand.vmem [shape: f32[1,8,1], index: 3, kind: input, shape index: {}]
  %s4 = inlined_call_operand.vmem [shape: f32[1,8,1], index: 4, kind: input, shape index: {}]
  %s5 = inlined_call_operand.hbm [shape: f32[2,8,256], index: 5, kind: output, shape index: {}]
  %s6 = sld [smem:[#allocation0]]
  $region57: #{tpu_custom_call.1} parent=0
    _
  %s8 = ssub.s32 1, %s6
  %s9 = scalar_select 0, %s8, %s6
  $region1: #{tpu_custom_call.1} parent=0
    #allocation2 [shape = 'u8[16384]{0}', space=vmem, size = 0x4000, scoped, tag = 'output window, operand 0, single buffered']
    #allocation3 [shape = 's32[2]{0}', space=sflag, size = 0x8, scoped, tag = 'scoped memory for tpu_custom_call.1']
    %10 = vsyncpa [#allocation3], 0
    loop: start=0, step=1, limit=4
    $region2: #{tpu_custom_call.1} parent=1 // loop_pre_header
      _
    $region3: #{tpu_custom_call.1} parent=1 // loop_header
      %s12 = sphi 0, %s16
      %p13 = scmp.ge.s32.totalorder %s12, 4
      %s20 = sphi 0, %s20
      %s22 = sphi 0, %s20
      %s23 = sphi 0, %s22
      %s37 = sphi 0, %s23
      %s43 = sphi 0, %s45
      %s46 = sphi 0, %s43
      %s47 = sphi 0, %s46
      %s63 = sphi 0, %s47
      %s67 = sphi 0, %s67
      %s69 = sphi 0, %s67
      %s70 = sphi 0, %s69
      %s84 = sphi 0, %s70
      %s88 = sphi 0, %s88
      %s90 = sphi 0, %s88
      %s91 = sphi 0, %s90
      %s105 = sphi 0, %s91
      %s109 = sphi 0, %s109
      %s111 = sphi 0, %s109
      %s112 = sphi 0, %s111
      %s126 = sphi 0, %s112
      %s130 = sphi 0, %s130
      %s132 = sphi 0, %s130
      %s133 = sphi 0, %s132
      %s147 = sphi 0, %s133
    $region4: #{tpu_custom_call.1} parent=1 // loop_header_branch
      %15 = sbr.rel (%p13) target = $region8
    $region5: #{tpu_custom_call.1} parent=1 // loop_body
      %s17 = ssub.s32 %s12, 1
      %s18 = ssub.s32 %s12, 2
      %s19 = sadd.s32 %s12, 1
      %s21 = sadd.s32 %s20, 1
      %p24 = scmp.eq.s32.totalorder %s12, 1
      %p25 = scmp.ne.s32.totalorder %s20, %s22
      %p26 = scmp.eq.s32.totalorder %s12, 0
      %p27 = por %p25, %p26
      %p28 = scmp.ne.s32.totalorder %s20, %s22
      %p29 = scmp.eq.s32.totalorder %s17, 1
      %p30 = por %p28, %p29
      %p31 = scmp.ne.s32.totalorder %s22, %s23
      %p32 = scmp.eq.s32.totalorder %s17, 0
      %p33 = por %p31, %p32
      %p34 = scmp.ne.s32.totalorder %s22, %s23
      %p35 = scmp.eq.s32.totalorder %s18, 1
      %p36 = por %p34, %p35
      %p38 = scmp.ne.s32.totalorder %s23, %s37
      %p39 = scmp.eq.s32.totalorder %s18, 0
      %p40 = por %p38, %p39
      %s41 = ssub.s32 %s12, %s19
      %p42 = scmp.eq.s32.totalorder %s41, 0
      %s44 = sadd.s32 %s43, 1
      %s45 = scalar_select %p42, %s43, %s44
      %p48 = pneg %p42
      %p49 = scmp.eq.s32.totalorder %s12, 1
      %p50 = por %p48, %p49
      %p51 = scmp.ne.s32.totalorder %s43, %s46
      %p52 = scmp.eq.s32.totalorder %s12, 0
      %p53 = por %p51, %p52
      %p54 = scmp.ne.s32.totalorder %s43, %s46
      %p55 = scmp.eq.s32.totalorder %s17, 1
      %p56 = por %p54, %p55
      %p57 = scmp.ne.s32.totalorder %s46, %s47
      %p58 = scmp.eq.s32.totalorder %s17, 0
      %p59 = por %p57, %p58
      %p60 = scmp.ne.s32.totalorder %s46, %s47
      %p61 = scmp.eq.s32.totalorder %s18, 1
      %p62 = por %p60, %p61
      %p64 = scmp.ne.s32.totalorder %s47, %s63
      %p65 = scmp.eq.s32.totalorder %s18, 0
      %p66 = por %p64, %p65
      %s68 = sadd.s32 %s67, 1
      %p71 = scmp.eq.s32.totalorder %s12, 1
      %p72 = scmp.ne.s32.totalorder %s67, %s69
      %p73 = scmp.eq.s32.totalorder %s12, 0
      %p74 = por %p72, %p73
      %p75 = scmp.ne.s32.totalorder %s67, %s69
      %p76 = scmp.eq.s32.totalorder %s17, 1
      %p77 = por %p75, %p76
      %p78 = scmp.ne.s32.totalorder %s69, %s70
      %p79 = scmp.eq.s32.totalorder %s17, 0
      %p80 = por %p78, %p79
      %p81 = scmp.ne.s32.totalorder %s69, %s70
      %p82 = scmp.eq.s32.totalorder %s18, 1
      %p83 = por %p81, %p82
      %p85 = scmp.ne.s32.totalorder %s70, %s84
      %p86 = scmp.eq.s32.totalorder %s18, 0
      %p87 = por %p85, %p86
      %s89 = sadd.s32 %s88, 1
      %p92 = scmp.eq.s32.totalorder %s12, 1
      %p93 = scmp.ne.s32.totalorder %s88, %s90
      %p94 = scmp.eq.s32.totalorder %s12, 0
      %p95 = por %p93, %p94
      %p96 = scmp.ne.s32.totalorder %s88, %s90
      %p97 = scmp.eq.s32.totalorder %s17, 1
      %p98 = por %p96, %p97
      %p99 = scmp.ne.s32.totalorder %s90, %s91
      %p100 = scmp.eq.s32.totalorder %s17, 0
      %p101 = por %p99, %p100
      %p102 = scmp.ne.s32.totalorder %s90, %s91
      %p103 = scmp.eq.s32.totalorder %s18, 1
      %p104 = por %p102, %p103
      %p106 = scmp.ne.s32.totalorder %s91, %s105
      %p107 = scmp.eq.s32.totalorder %s18, 0
      %p108 = por %p106, %p107
      %s110 = sadd.s32 %s109, 1
      %p113 = scmp.eq.s32.totalorder %s12, 1
      %p114 = scmp.ne.s32.totalorder %s109, %s111
      %p115 = scmp.eq.s32.totalorder %s12, 0
      %p116 = por %p114, %p115
      %p117 = scmp.ne.s32.totalorder %s109, %s111
      %p118 = scmp.eq.s32.totalorder %s17, 1
      %p119 = por %p117, %p118
      %p120 = scmp.ne.s32.totalorder %s111, %s112
      %p121 = scmp.eq.s32.totalorder %s17, 0
      %p122 = por %p120, %p121
      %p123 = scmp.ne.s32.totalorder %s111, %s112
      %p124 = scmp.eq.s32.totalorder %s18, 1
      %p125 = por %p123, %p124
      %p127 = scmp.ne.s32.totalorder %s112, %s126
      %p128 = scmp.eq.s32.totalorder %s18, 0
      %p129 = por %p127, %p128
      %s131 = sadd.s32 %s130, 1
      %p134 = scmp.eq.s32.totalorder %s12, 1
      %p135 = scmp.ne.s32.totalorder %s130, %s132
      %p136 = scmp.eq.s32.totalorder %s12, 0
      %p137 = por %p135, %p136
      %p138 = scmp.ne.s32.totalorder %s130, %s132
      %p139 = scmp.eq.s32.totalorder %s17, 1
      %p140 = por %p138, %p139
      %p141 = scmp.ne.s32.totalorder %s132, %s133
      %p142 = scmp.eq.s32.totalorder %s17, 0
      %p143 = por %p141, %p142
      %p144 = scmp.ne.s32.totalorder %s132, %s133
      %p145 = scmp.eq.s32.totalorder %s18, 1
      %p146 = por %p144, %p145
      %p148 = scmp.ne.s32.totalorder %s133, %s147
      %p149 = scmp.eq.s32.totalorder %s18, 0
      %p150 = por %p148, %p149
      %p151 = scmp.le.s32.totalorder 1, %s12
      %p152 = scmp.lt.s32.totalorder %s12, 3
      %p153 = pnand %p151, %p152
      %p154 = pneg %p153
      // Predicated region
      $region9: #{tpu_custom_call.1} parent=5 // pred_check
        _
      $region10: #{tpu_custom_call.1} parent=5 // pred_check_branch
        %156 = sbr.rel (%p153) target = $region12
      $region11: #{tpu_custom_call.1} parent=5 // pred_region
        %s157 = ssub.s32 %s12, 1
        // Predicated region
        $region13: #{tpu_custom_call.1} parent=11 // pred_check
          %p158 = pneg %p33
        $region14: #{tpu_custom_call.1} parent=11 // pred_check_branch
          %160 = sbr.rel (%p158) target = $region16
        $region15: #{tpu_custom_call.1} parent=11 // pred_region
          _
        $region16: #{tpu_custom_call.1} parent=11 // pred_fallthru
          _
        // Predicated region
        $region17: #{tpu_custom_call.1} parent=11 // pred_check
          %p161 = pneg %p80
        $region18: #{tpu_custom_call.1} parent=11 // pred_check_branch
          %163 = sbr.rel (%p161) target = $region20
        $region19: #{tpu_custom_call.1} parent=11 // pred_region
          _
        $region20: #{tpu_custom_call.1} parent=11 // pred_fallthru
          _
        // Predicated region
        $region21: #{tpu_custom_call.1} parent=11 // pred_check
          %p164 = pneg %p101
        $region22: #{tpu_custom_call.1} parent=11 // pred_check_branch
          %166 = sbr.rel (%p164) target = $region24
        $region23: #{tpu_custom_call.1} parent=11 // pred_region
          _
        $region24: #{tpu_custom_call.1} parent=11 // pred_fallthru
          _
        // Predicated region
        $region25: #{tpu_custom_call.1} parent=11 // pred_check
          %p167 = pneg %p122
        $region26: #{tpu_custom_call.1} parent=11 // pred_check_branch
          %169 = sbr.rel (%p167) target = $region28
        $region27: #{tpu_custom_call.1} parent=11 // pred_region
          _
        $region28: #{tpu_custom_call.1} parent=11 // pred_fallthru
          _
      $region12: #{tpu_custom_call.1} parent=5 // pred_fallthru
        _
      %p170 = scmp.lt.s32.totalorder %s12, 2
      // Predicated region
      $region29: #{tpu_custom_call.1} parent=5 // pred_check
        %p171 = pneg %p170
      $region30: #{tpu_custom_call.1} parent=5 // pred_check_branch
        %173 = sbr.rel (%p171) target = $region32
      $region31: #{tpu_custom_call.1} parent=5 // pred_region
        // Predicated region
        $region33: #{tpu_custom_call.1} parent=31 // pred_check
          %p174 = pneg %p53
        $region34: #{tpu_custom_call.1} parent=31 // pred_check_branch
          %176 = sbr.rel (%p174) target = $region36
        $region35: #{tpu_custom_call.1} parent=31 // pred_region
          %p177 = scmp.lt.s32.totalorder %s12, 1
          %s178 = scalar_select %p177, %s12, 1
          %s179 = smul.addr %s178, 3
          %s180 = smul.addr %s179, 4
          %s181 = scalar_lea.vmem %s1, %s180
        $region36: #{tpu_custom_call.1} parent=31 // pred_fallthru
          _
      $region32: #{tpu_custom_call.1} parent=5 // pred_fallthru
        _
      %p182 = scmp.le.s32.totalorder 1, %s12
      %p183 = scmp.lt.s32.totalorder %s12, 3
      %p184 = pnand %p182, %p183
      %p185 = pneg %p184
      // Predicated region
      $region37: #{tpu_custom_call.1} parent=5 // pred_check
        _
      $region38: #{tpu_custom_call.1} parent=5 // pred_check_branch
        %187 = sbr.rel (%p184) target = $region40
      $region39: #{tpu_custom_call.1} parent=5 // pred_region
        %s188 = ssub.s32 %s12, 1
        %p189 = pneg %p33
        %p190 = pneg %p30
        %p191 = scmp.lt.s32.totalorder %s17, 1
        %s192 = scalar_select %p191, %s17, 1
        %s193 = smul.addr %s192, 3
        %s194 = smul.addr %s193, 4
        %s195 = scalar_lea.vmem %s1, %s194
        %p196 = pneg %p59
        %p197 = pneg %p56
        %p198 = pneg %p80
        %p199 = pneg %p77
        %p200 = pneg %p101
        %p201 = pneg %p98
        %p202 = pneg %p122
        %p203 = pneg %p119
        %p204 = pneg %p143
        %p205 = pneg %p140
        %p206 = scmp.lt.s32.totalorder %s17, 1
        %s207 = scalar_select %p206, %s17, 1
        %s208 = smul.addr %s207, 3
        %s209 = smul.addr %s208, 4
        %s210 = scalar_lea.vmem %s1, %s209
        %v214 = vld [vmem:[%s0] sm:$0x3]
        %v215 = vld [vmem:[%s210] sm:$0xff]
        %vm216 = vcmp.ge.s32.totalorder %v214, 1
        %vm217 = vcmp.lt.s32.totalorder %v214, 17
        %vm218 = vmand %vm216, %vm217
        %v219 = vsel %vm218, 1, 0
        %v220 = vlaneseq
        %v221 = vshrl.u32 %v220, 7
        %v222 = vsub.s32 0, %v221
        %v223 = vrot.slane %v219, %v222
        %v224 = vlaneseq
        %v225 = vshrl.u32 %v224, 7
        %v226 = vsub.s32 1, %v225
        %v227 = vrot.slane %v219, %v226
        %vm228 = vcmp.eq.s32.totalorder %v223, 1
        %vm229 = vcmp.eq.s32.totalorder %v227, 1
        %vm230 = vmpackc.low %vm229, %vm228
        %v231 = vsel %vm230, %v215, 0
        %v232 = vld [vmem:[%s2] sm:$0xf]
        %v233 = vld [vmem:[%s210] sm:$0xff]
        %v234 = vld [vmem:[%s210 + $0x8] sm:$0xf]
        %s235 = scalar_lea.vmem %s2, 4
        %v236 = vld [vmem:[%s235] sm:$0xf]
        %v239 = vunpack.c.l.b16 %v233
        %v240 = vunpack.c.h.b16 %v233
        %v241 = vunpack.c.l.b16 %v234
        %v242 = vpack.c.b16 %v239, %v239
        %v243 = vpack.c.b16 %v240, %v240
        %v244 = vpack.c.b16 %v241, %v241
        %245 = vrot.lane.b32.xlu0 %v242, 127
        %v246 = vpop.permute.xlu0 %245
        %247 = vrot.lane.b32.xlu0 %v243, 127
        %v248 = vpop.permute.xlu0 %247
        %249 = vrot.lane.b32.xlu0 %v244, 127
        %v250 = vpop.permute.xlu0 %249
        %vm251 = vcmask 1039360
        %v252 = vsel %vm251, %v246, %v248
        %v253 = vsel %vm251, %v248, %v250
        %vm254 = vcmask 64512
        %v256 = vsel %vm254, %v236, 0
        %vm258 = vcmask 1043456
        %v260 = vsel %vm258, %v252, 0
        %v263 = vsel %vm258, %v253, 0
        %265 = vmatprep.subr.bf16.mxu0 %v263
        %266 = vmatpush1.bf16.msra.mxu0 %v260
        %267 = vmatprep.subr.bf16.mxu0 0
        %268 = vmatpush1.bf16.msra.mxu0 0
        %269 = vmatprep.subr.bf16.mxu0 0
        %270 = vmatpush1.bf16.msra.mxu0 0
        %271 = vmatprep.subr.bf16.mxu0 0
        %272 = vmatpush1.bf16.msra.mxu0 0
        %273 = vmatprep.subr.bf16.mxu0 0
        %274 = vmatpush1.bf16.msra.mxu0 0
        %275 = vmatprep.subr.bf16.mxu0 0
        %276 = vmatpush1.bf16.msra.mxu0 0
        %277 = vmatprep.subr.bf16.mxu0 0
        %278 = vmatpush1.bf16.msra.mxu0 0
        %279 = vmatprep.subr.bf16.mxu0 0
        %280 = vmatpush1.bf16.msra.mxu0 0
        %281 = vmatprep.subr.bf16.mxu0 0
        %282 = vmatpush1.bf16.msra.mxu0 0
        %283 = vmatprep.subr.bf16.mxu0 0
        %284 = vmatpush1.bf16.msra.mxu0 0
        %285 = vmatprep.subr.bf16.mxu0 0
        %286 = vmatpush1.bf16.msra.mxu0 0
        %287 = vmatprep.subr.bf16.mxu0 0
        %288 = vmatpush1.bf16.msra.mxu0 0
        %289 = vmatprep.subr.bf16.mxu0 0
        %290 = vmatpush1.bf16.msra.mxu0 0
        %291 = vmatprep.subr.bf16.mxu0 0
        %292 = vmatpush1.bf16.msra.mxu0 0
        %293 = vmatprep.subr.bf16.mxu0 0
        %294 = vmatpush1.bf16.msra.mxu0 0
        %295 = vmatprep.subr.bf16.mxu0 0
        %296 = vmatpush1.bf16.msra.mxu0 0
        %297 = vmatprep.mubr.bf16.mxu0 0
        %298 = vmatmul.mubr.bf16.gmra.mrb[0].mxu0 %v256
        %v299 = vpop.f32.mrb[0].mxu0
        %v300 = vadd.f32 0.0, %v299
        %v301 = vpop.f32.mrb[0].mxu0
        %v302 = vadd.f32 0.0, %v301
        %v303 = vpop.f32.mrb[0].mxu0
        %v304 = vpop.f32.mrb[0].mxu0
        %305 = vdwg.mxu0
        %v307 = vunpack.c.l.b16 %v231
        %v308 = vunpack.c.h.b16 %v231
        %v309 = vpack.c.b16 %v307, %v307
        %v310 = vpack.c.b16 %v308, %v308
        %v312 = vsel %vm254, %v232, 0
        %v315 = vsel %vm258, %v309, 0
        %v318 = vsel %vm258, %v310, 0
        %320 = vmatprep.subr.bf16.mxu0 %v318
        %321 = vmatpush1.bf16.msra.mxu0 %v315
        %322 = vmatprep.subr.bf16.mxu0 0
        %323 = vmatpush1.bf16.msra.mxu0 0
        %324 = vmatprep.subr.bf16.mxu0 0
        %325 = vmatpush1.bf16.msra.mxu0 0
        %326 = vmatprep.subr.bf16.mxu0 0
        %327 = vmatpush1.bf16.msra.mxu0 0
        %328 = vmatprep.subr.bf16.mxu0 0
        %329 = vmatpush1.bf16.msra.mxu0 0
        %330 = vmatprep.subr.bf16.mxu0 0
        %331 = vmatpush1.bf16.msra.mxu0 0
        %332 = vmatprep.subr.bf16.mxu0 0
        %333 = vmatpush1.bf16.msra.mxu0 0
        %334 = vmatprep.subr.bf16.mxu0 0
        %335 = vmatpush1.bf16.msra.mxu0 0
        %336 = vmatprep.subr.bf16.mxu0 0
        %337 = vmatpush1.bf16.msra.mxu0 0
        %338 = vmatprep.subr.bf16.mxu0 0
        %339 = vmatpush1.bf16.msra.mxu0 0
        %340 = vmatprep.subr.bf16.mxu0 0
        %341 = vmatpush1.bf16.msra.mxu0 0
        %342 = vmatprep.subr.bf16.mxu0 0
        %343 = vmatpush1.bf16.msra.mxu0 0
        %344 = vmatprep.subr.bf16.mxu0 0
        %345 = vmatpush1.bf16.msra.mxu0 0
        %346 = vmatprep.subr.bf16.mxu0 0
        %347 = vmatpush1.bf16.msra.mxu0 0
        %348 = vmatprep.subr.bf16.mxu0 0
        %349 = vmatpush1.bf16.msra.mxu0 0
        %350 = vmatprep.subr.bf16.mxu0 0
        %351 = vmatpush1.bf16.msra.mxu0 0
        %352 = vmatprep.mubr.bf16.mxu0 0
        %353 = vmatmul.mubr.bf16.gmra.mrb[0].mxu0 %v312
        %v354 = vpop.f32.mrb[0].mxu0
        %v355 = vadd.f32 %v300, %v354
        %v356 = vpop.f32.mrb[0].mxu0
        %v357 = vadd.f32 %v302, %v356
        %v358 = vpop.f32.mrb[0].mxu0
        %v359 = vpop.f32.mrb[0].mxu0
        %360 = vdwg.mxu0
        %vm361 = vcmp.ge.s32.totalorder %v214, 4294967295
        %vm362 = vcmp.lt.s32.totalorder %v214, 15
        %vm363 = vmand %vm361, %vm362
        %v364 = vsel %vm363, 1, 0
        %v365 = vlaneseq
        %v366 = vshrl.u32 %v365, 7
        %v367 = vsub.s32 0, %v366
        %v368 = vrot.slane %v364, %v367
        %v369 = vlaneseq
        %v370 = vshrl.u32 %v369, 7
        %v371 = vsub.s32 1, %v370
        %v372 = vrot.slane %v364, %v371
        %vm373 = vcmp.eq.s32.totalorder %v368, 1
        %vm374 = vcmp.eq.s32.totalorder %v372, 1
        %vm375 = vmpackc.low %vm374, %vm373
        %v376 = vsel %vm375, 65537, 0
        %377 = vrot.lane.b32.xlu0 %v376, 2
        %v378 = vpop.permute.xlu0 %377
        %v379 = vrot.slane %v378, 4
        %vm380 = vcmask 15360
        %v381 = vsel %vm380, %v379, %v378
        %vm382 = vcmp.ne.s16.totalorder %v381, 0
        %vm383 = vcmp.ne.s16.totalorder %v379, 0
        %v384 = vsel %vm382, %v233, 0
        %v385 = vsel %vm383, %v234, 0
        %s386 = scalar_lea.vmem %s2, 8
        %v387 = vld [vmem:[%s386] sm:$0xf]
        %v390 = vunpack.c.l.b16 %v384
        %v391 = vunpack.c.h.b16 %v384
        %v392 = vunpack.c.l.b16 %v385
        %v393 = vpack.c.b16 %v390, %v390
        %v394 = vpack.c.b16 %v391, %v391
        %v395 = vpack.c.b16 %v392, %v392
        %396 = vrot.lane.b32.xlu0 %v393, 126
        %v397 = vpop.permute.xlu0 %396
        %398 = vrot.lane.b32.xlu0 %v394, 126
        %v399 = vpop.permute.xlu0 %398
        %400 = vrot.lane.b32.xlu0 %v395, 126
        %v401 = vpop.permute.xlu0 %400
        %vm402 = vcmask 1031168
        %v403 = vsel %vm402, %v397, %v399
        %v404 = vsel %vm402, %v399, %v401
        %v406 = vsel %vm254, %v387, 0
        %v409 = vsel %vm258, %v403, 0
        %v412 = vsel %vm258, %v404, 0
        %414 = vmatprep.subr.bf16.mxu0 %v412
        %415 = vmatpush1.bf16.msra.mxu0 %v409
        %416 = vmatprep.subr.bf16.mxu0 0
        %417 = vmatpush1.bf16.msra.mxu0 0
        %418 = vmatprep.subr.bf16.mxu0 0
        %419 = vmatpush1.bf16.msra.mxu0 0
        %420 = vmatprep.subr.bf16.mxu0 0
        %421 = vmatpush1.bf16.msra.mxu0 0
        %422 = vmatprep.subr.bf16.mxu0 0
        %423 = vmatpush1.bf16.msra.mxu0 0
        %424 = vmatprep.subr.bf16.mxu0 0
        %425 = vmatpush1.bf16.msra.mxu0 0
        %426 = vmatprep.subr.bf16.mxu0 0
        %427 = vmatpush1.bf16.msra.mxu0 0
        %428 = vmatprep.subr.bf16.mxu0 0
        %429 = vmatpush1.bf16.msra.mxu0 0
        %430 = vmatprep.subr.bf16.mxu0 0
        %431 = vmatpush1.bf16.msra.mxu0 0
        %432 = vmatprep.subr.bf16.mxu0 0
        %433 = vmatpush1.bf16.msra.mxu0 0
        %434 = vmatprep.subr.bf16.mxu0 0
        %435 = vmatpush1.bf16.msra.mxu0 0
        %436 = vmatprep.subr.bf16.mxu0 0
        %437 = vmatpush1.bf16.msra.mxu0 0
        %438 = vmatprep.subr.bf16.mxu0 0
        %439 = vmatpush1.bf16.msra.mxu0 0
        %440 = vmatprep.subr.bf16.mxu0 0
        %441 = vmatpush1.bf16.msra.mxu0 0
        %442 = vmatprep.subr.bf16.mxu0 0
        %443 = vmatpush1.bf16.msra.mxu0 0
        %444 = vmatprep.subr.bf16.mxu0 0
        %445 = vmatpush1.bf16.msra.mxu0 0
        %446 = vmatprep.mubr.bf16.mxu0 0
        %447 = vmatmul.mubr.bf16.gmra.mrb[0].mxu0 %v406
        %v448 = vpop.f32.mrb[0].mxu0
        %v449 = vadd.f32 0.0, %v448
        %v450 = vpop.f32.mrb[0].mxu0
        %v451 = vadd.f32 0.0, %v450
        %v452 = vpop.f32.mrb[0].mxu0
        %v453 = vpop.f32.mrb[0].mxu0
        %454 = vdwg.mxu0
        %v455 = vadd.f32 %v355, %v449
        %v456 = vadd.f32 %v357, %v451
        %v457 = vsel %vm230, 65537, 0
        %458 = vrot.lane.b32.xlu0 %v457, 16
        %v459 = vpop.permute.xlu0 %458
        %v460 = vrot.slane %v459, 4
        %vm461 = vcmask 130048
        %v462 = vsel %vm461, %v460, %v459
        %vm463 = vcmp.ne.s16.totalorder %v462, 0
        %vm464 = vcmp.ne.s16.totalorder %v460, 0
        %v465 = vsel %vm463, %v233, 0
        %v466 = vsel %vm464, %v234, 0
        %s467 = scalar_lea.vmem %s2, 12
        %v468 = vld [vmem:[%s467] sm:$0xf]
        %v471 = vunpack.c.l.b16 %v465
        %v472 = vunpack.c.h.b16 %v465
        %v473 = vunpack.c.l.b16 %v466
        %v474 = vpack.c.b16 %v471, %v471
        %v475 = vpack.c.b16 %v472, %v472
        %v476 = vpack.c.b16 %v473, %v473
        %477 = vrot.lane.b32.xlu0 %v474, 112
        %v478 = vpop.permute.xlu0 %477
        %479 = vrot.lane.b32.xlu0 %v475, 112
        %v480 = vpop.permute.xlu0 %479
        %481 = vrot.lane.b32.xlu0 %v476, 112
        %v482 = vpop.permute.xlu0 %481
        %vm483 = vcmask 916480
        %v484 = vsel %vm483, %v478, %v480
        %v485 = vsel %vm483, %v480, %v482
        %v487 = vsel %vm254, %v468, 0
        %v490 = vsel %vm258, %v484, 0
        %v493 = vsel %vm258, %v485, 0
        %495 = vmatprep.subr.bf16.mxu0 %v493
        %496 = vmatpush1.bf16.msra.mxu0 %v490
        %497 = vmatprep.subr.bf16.mxu0 0
        %498 = vmatpush1.bf16.msra.mxu0 0
        %499 = vmatprep.subr.bf16.mxu0 0
        %500 = vmatpush1.bf16.msra.mxu0 0
        %501 = vmatprep.subr.bf16.mxu0 0
        %502 = vmatpush1.bf16.msra.mxu0 0
        %503 = vmatprep.subr.bf16.mxu0 0
        %504 = vmatpush1.bf16.msra.mxu0 0
        %505 = vmatprep.subr.bf16.mxu0 0
        %506 = vmatpush1.bf16.msra.mxu0 0
        %507 = vmatprep.subr.bf16.mxu0 0
        %508 = vmatpush1.bf16.msra.mxu0 0
        %509 = vmatprep.subr.bf16.mxu0 0
        %510 = vmatpush1.bf16.msra.mxu0 0
        %511 = vmatprep.subr.bf16.mxu0 0
        %512 = vmatpush1.bf16.msra.mxu0 0
        %513 = vmatprep.subr.bf16.mxu0 0
        %514 = vmatpush1.bf16.msra.mxu0 0
        %515 = vmatprep.subr.bf16.mxu0 0
        %516 = vmatpush1.bf16.msra.mxu0 0
        %517 = vmatprep.subr.bf16.mxu0 0
        %518 = vmatpush1.bf16.msra.mxu0 0
        %519 = vmatprep.subr.bf16.mxu0 0
        %520 = vmatpush1.bf16.msra.mxu0 0
        %521 = vmatprep.subr.bf16.mxu0 0
        %522 = vmatpush1.bf16.msra.mxu0 0
        %523 = vmatprep.subr.bf16.mxu0 0
        %524 = vmatpush1.bf16.msra.mxu0 0
        %525 = vmatprep.subr.bf16.mxu0 0
        %526 = vmatpush1.bf16.msra.mxu0 0
        %527 = vmatprep.mubr.bf16.mxu0 0
        %528 = vmatmul.mubr.bf16.gmra.mrb[0].mxu0 %v487
        %v529 = vpop.f32.mrb[0].mxu0
        %v530 = vadd.f32 0.0, %v529
        %v531 = vpop.f32.mrb[0].mxu0
        %v532 = vadd.f32 0.0, %v531
        %v533 = vpop.f32.mrb[0].mxu0
        %v534 = vpop.f32.mrb[0].mxu0
        %535 = vdwg.mxu0
        %v536 = vadd.f32 %v455, %v530
        %v537 = vadd.f32 %v456, %v532
        %s538 = scalar_lea.vmem %s2, 16
        %v539 = vld [vmem:[%s538] sm:$0xf]
        %540 = vrot.lane.b32.xlu0 %v242, 111
        %v541 = vpop.permute.xlu0 %540
        %542 = vrot.lane.b32.xlu0 %v243, 111
        %v543 = vpop.permute.xlu0 %542
        %544 = vrot.lane.b32.xlu0 %v244, 111
        %v545 = vpop.permute.xlu0 %544
        %vm546 = vcmask 908288
        %v547 = vsel %vm546, %v541, %v543
        %v548 = vsel %vm546, %v543, %v545
        %v550 = vsel %vm254, %v539, 0
        %v553 = vsel %vm258, %v547, 0
        %v556 = vsel %vm258, %v548, 0
        %558 = vmatprep.subr.bf16.mxu0 %v556
        %559 = vmatpush1.bf16.msra.mxu0 %v553
        %560 = vmatprep.subr.bf16.mxu0 0
        %561 = vmatpush1.bf16.msra.mxu0 0
        %562 = vmatprep.subr.bf16.mxu0 0
        %563 = vmatpush1.bf16.msra.mxu0 0
        %564 = vmatprep.subr.bf16.mxu0 0
        %565 = vmatpush1.bf16.msra.mxu0 0
        %566 = vmatprep.subr.bf16.mxu0 0
        %567 = vmatpush1.bf16.msra.mxu0 0
        %568 = vmatprep.subr.bf16.mxu0 0
        %569 = vmatpush1.bf16.msra.mxu0 0
        %570 = vmatprep.subr.bf16.mxu0 0
        %571 = vmatpush1.bf16.msra.mxu0 0
        %572 = vmatprep.subr.bf16.mxu0 0
        %573 = vmatpush1.bf16.msra.mxu0 0
        %574 = vmatprep.subr.bf16.mxu0 0
        %575 = vmatpush1.bf16.msra.mxu0 0
        %576 = vmatprep.subr.bf16.mxu0 0
        %577 = vmatpush1.bf16.msra.mxu0 0
        %578 = vmatprep.subr.bf16.mxu0 0
        %579 = vmatpush1.bf16.msra.mxu0 0
        %580 = vmatprep.subr.bf16.mxu0 0
        %581 = vmatpush1.bf16.msra.mxu0 0
        %582 = vmatprep.subr.bf16.mxu0 0
        %583 = vmatpush1.bf16.msra.mxu0 0
        %584 = vmatprep.subr.bf16.mxu0 0
        %585 = vmatpush1.bf16.msra.mxu0 0
        %586 = vmatprep.subr.bf16.mxu0 0
        %587 = vmatpush1.bf16.msra.mxu0 0
        %588 = vmatprep.subr.bf16.mxu0 0
        %589 = vmatpush1.bf16.msra.mxu0 0
        %590 = vmatprep.mubr.bf16.mxu0 0
        %591 = vmatmul.mubr.bf16.gmra.mrb[0].mxu0 %v550
        %v592 = vpop.f32.mrb[0].mxu0
        %v593 = vadd.f32 0.0, %v592
        %v594 = vpop.f32.mrb[0].mxu0
        %v595 = vadd.f32 0.0, %v594
        %v596 = vpop.f32.mrb[0].mxu0
        %v597 = vpop.f32.mrb[0].mxu0
        %598 = vdwg.mxu0
        %v599 = vadd.f32 %v536, %v593
        %v600 = vadd.f32 %v537, %v595
        %601 = vrot.lane.b32.xlu0 %v376, 18
        %v602 = vpop.permute.xlu0 %601
        %v603 = vrot.slane %v602, 4
        %vm604 = vcmask 146432
        %v605 = vsel %vm604, %v603, %v602
        %vm606 = vcmp.ne.s16.totalorder %v605, 0
        %vm607 = vcmp.ne.s16.totalorder %v603, 0
        %v608 = vsel %vm606, %v233, 0
        %v609 = vsel %vm607, %v234, 0
        %s610 = scalar_lea.vmem %s2, 20
        %v611 = vld [vmem:[%s610] sm:$0xf]
        %v614 = vunpack.c.l.b16 %v608
        %v615 = vunpack.c.h.b16 %v608
        %v616 = vunpack.c.l.b16 %v609
        %v617 = vpack.c.b16 %v614, %v614
        %v618 = vpack.c.b16 %v615, %v615
        %v619 = vpack.c.b16 %v616, %v616
        %620 = vrot.lane.b32.xlu0 %v617, 110
        %v621 = vpop.permute.xlu0 %620
        %622 = vrot.lane.b32.xlu0 %v618, 110
        %v623 = vpop.permute.xlu0 %622
        %624 = vrot.lane.b32.xlu0 %v619, 110
        %v625 = vpop.permute.xlu0 %624
        %vm626 = vcmask 900096
        %v627 = vsel %vm626, %v621, %v623
        %v628 = vsel %vm626, %v623, %v625
        %v630 = vsel %vm254, %v611, 0
        %v633 = vsel %vm258, %v627, 0
        %v636 = vsel %vm258, %v628, 0
        %638 = vmatprep.subr.bf16.mxu0 %v636
        %639 = vmatpush1.bf16.msra.mxu0 %v633
        %640 = vmatprep.subr.bf16.mxu0 0
        %641 = vmatpush1.bf16.msra.mxu0 0
        %642 = vmatprep.subr.bf16.mxu0 0
        %643 = vmatpush1.bf16.msra.mxu0 0
        %644 = vmatprep.subr.bf16.mxu0 0
        %645 = vmatpush1.bf16.msra.mxu0 0
        %646 = vmatprep.subr.bf16.mxu0 0
        %647 = vmatpush1.bf16.msra.mxu0 0
        %648 = vmatprep.subr.bf16.mxu0 0
        %649 = vmatpush1.bf16.msra.mxu0 0
        %650 = vmatprep.subr.bf16.mxu0 0
        %651 = vmatpush1.bf16.msra.mxu0 0
        %652 = vmatprep.subr.bf16.mxu0 0
        %653 = vmatpush1.bf16.msra.mxu0 0
        %654 = vmatprep.subr.bf16.mxu0 0
        %655 = vmatpush1.bf16.msra.mxu0 0
        %656 = vmatprep.subr.bf16.mxu0 0
        %657 = vmatpush1.bf16.msra.mxu0 0
        %658 = vmatprep.subr.bf16.mxu0 0
        %659 = vmatpush1.bf16.msra.mxu0 0
        %660 = vmatprep.subr.bf16.mxu0 0
        %661 = vmatpush1.bf16.msra.mxu0 0
        %662 = vmatprep.subr.bf16.mxu0 0
        %663 = vmatpush1.bf16.msra.mxu0 0
        %664 = vmatprep.subr.bf16.mxu0 0
        %665 = vmatpush1.bf16.msra.mxu0 0
        %666 = vmatprep.subr.bf16.mxu0 0
        %667 = vmatpush1.bf16.msra.mxu0 0
        %668 = vmatprep.subr.bf16.mxu0 0
        %669 = vmatpush1.bf16.msra.mxu0 0
        %670 = vmatprep.mubr.bf16.mxu0 0
        %671 = vmatmul.mubr.bf16.gmra.mrb[0].mxu0 %v630
        %v672 = vpop.f32.mrb[0].mxu0
        %v673 = vadd.f32 0.0, %v672
        %v674 = vpop.f32.mrb[0].mxu0
        %v675 = vadd.f32 0.0, %v674
        %v676 = vpop.f32.mrb[0].mxu0
        %v677 = vpop.f32.mrb[0].mxu0
        %678 = vdwg.mxu0
        %v679 = vadd.f32 %v599, %v673
        %v680 = vadd.f32 %v600, %v675
        %681 = vrot.lane.b32.xlu0 %v457, 32
        %v682 = vpop.permute.xlu0 %681
        %v683 = vrot.slane %v682, 4
        %vm684 = vcmask 261120
        %v685 = vsel %vm684, %v683, %v682
        %vm686 = vcmp.ne.s16.totalorder %v685, 0
        %vm687 = vcmp.ne.s16.totalorder %v683, 0
        %v688 = vsel %vm686, %v233, 0
        %v689 = vsel %vm687, %v234, 0
        %s690 = scalar_lea.vmem %s2, 24
        %v691 = vld [vmem:[%s690] sm:$0xf]
        %v694 = vunpack.c.l.b16 %v688
        %v695 = vunpack.c.h.b16 %v688
        %v696 = vunpack.c.l.b16 %v689
        %v697 = vpack.c.b16 %v694, %v694
        %v698 = vpack.c.b16 %v695, %v695
        %v699 = vpack.c.b16 %v696, %v696
        %700 = vrot.lane.b32.xlu0 %v697, 96
        %v701 = vpop.permute.xlu0 %700
        %702 = vrot.lane.b32.xlu0 %v698, 96
        %v703 = vpop.permute.xlu0 %702
        %704 = vrot.lane.b32.xlu0 %v699, 96
        %v705 = vpop.permute.xlu0 %704
        %vm706 = vcmask 785408
        %v707 = vsel %vm706, %v701, %v703
        %v708 = vsel %vm706, %v703, %v705
        %v710 = vsel %vm254, %v691, 0
        %v713 = vsel %vm258, %v707, 0
        %v716 = vsel %vm258, %v708, 0
        %718 = vmatprep.subr.bf16.mxu0 %v716
        %719 = vmatpush1.bf16.msra.mxu0 %v713
        %720 = vmatprep.subr.bf16.mxu0 0
        %721 = vmatpush1.bf16.msra.mxu0 0
        %722 = vmatprep.subr.bf16.mxu0 0
        %723 = vmatpush1.bf16.msra.mxu0 0
        %724 = vmatprep.subr.bf16.mxu0 0
        %725 = vmatpush1.bf16.msra.mxu0 0
        %726 = vmatprep.subr.bf16.mxu0 0
        %727 = vmatpush1.bf16.msra.mxu0 0
        %728 = vmatprep.subr.bf16.mxu0 0
        %729 = vmatpush1.bf16.msra.mxu0 0
        %730 = vmatprep.subr.bf16.mxu0 0
        %731 = vmatpush1.bf16.msra.mxu0 0
        %732 = vmatprep.subr.bf16.mxu0 0
        %733 = vmatpush1.bf16.msra.mxu0 0
        %734 = vmatprep.subr.bf16.mxu0 0
        %735 = vmatpush1.bf16.msra.mxu0 0
        %736 = vmatprep.subr.bf16.mxu0 0
        %737 = vmatpush1.bf16.msra.mxu0 0
        %738 = vmatprep.subr.bf16.mxu0 0
        %739 = vmatpush1.bf16.msra.mxu0 0
        %740 = vmatprep.subr.bf16.mxu0 0
        %741 = vmatpush1.bf16.msra.mxu0 0
        %742 = vmatprep.subr.bf16.mxu0 0
        %743 = vmatpush1.bf16.msra.mxu0 0
        %744 = vmatprep.subr.bf16.mxu0 0
        %745 = vmatpush1.bf16.msra.mxu0 0
        %746 = vmatprep.subr.bf16.mxu0 0
        %747 = vmatpush1.bf16.msra.mxu0 0
        %748 = vmatprep.subr.bf16.mxu0 0
        %749 = vmatpush1.bf16.msra.mxu0 0
        %750 = vmatprep.mubr.bf16.mxu0 0
        %751 = vmatmul.mubr.bf16.gmra.mrb[0].mxu0 %v710
        %v752 = vpop.f32.mrb[0].mxu0
        %v753 = vadd.f32 0.0, %v752
        %v754 = vpop.f32.mrb[0].mxu0
        %v755 = vadd.f32 0.0, %v754
        %v756 = vpop.f32.mrb[0].mxu0
        %v757 = vpop.f32.mrb[0].mxu0
        %758 = vdwg.mxu0
        %v759 = vadd.f32 %v679, %v753
        %v760 = vadd.f32 %v680, %v755
        %s761 = scalar_lea.vmem %s2, 28
        %v762 = vld [vmem:[%s761] sm:$0xf]
        %763 = vrot.lane.b32.xlu0 %v242, 95
        %v764 = vpop.permute.xlu0 %763
        %765 = vrot.lane.b32.xlu0 %v243, 95
        %v766 = vpop.permute.xlu0 %765
        %767 = vrot.lane.b32.xlu0 %v244, 95
        %v768 = vpop.permute.xlu0 %767
        %vm769 = vcmask 777216
        %v770 = vsel %vm769, %v764, %v766
        %v771 = vsel %vm769, %v766, %v768
        %v773 = vsel %vm254, %v762, 0
        %v776 = vsel %vm258, %v770, 0
        %v779 = vsel %vm258, %v771, 0
        %781 = vmatprep.subr.bf16.mxu0 %v779
        %782 = vmatpush1.bf16.msra.mxu0 %v776
        %783 = vmatprep.subr.bf16.mxu0 0
        %784 = vmatpush1.bf16.msra.mxu0 0
        %785 = vmatprep.subr.bf16.mxu0 0
        %786 = vmatpush1.bf16.msra.mxu0 0
        %787 = vmatprep.subr.bf16.mxu0 0
        %788 = vmatpush1.bf16.msra.mxu0 0
        %789 = vmatprep.subr.bf16.mxu0 0
        %790 = vmatpush1.bf16.msra.mxu0 0
        %791 = vmatprep.subr.bf16.mxu0 0
        %792 = vmatpush1.bf16.msra.mxu0 0
        %793 = vmatprep.subr.bf16.mxu0 0
        %794 = vmatpush1.bf16.msra.mxu0 0
        %795 = vmatprep.subr.bf16.mxu0 0
        %796 = vmatpush1.bf16.msra.mxu0 0
        %797 = vmatprep.subr.bf16.mxu0 0
        %798 = vmatpush1.bf16.msra.mxu0 0
        %799 = vmatprep.subr.bf16.mxu0 0
        %800 = vmatpush1.bf16.msra.mxu0 0
        %801 = vmatprep.subr.bf16.mxu0 0
        %802 = vmatpush1.bf16.msra.mxu0 0
        %803 = vmatprep.subr.bf16.mxu0 0
        %804 = vmatpush1.bf16.msra.mxu0 0
        %805 = vmatprep.subr.bf16.mxu0 0
        %806 = vmatpush1.bf16.msra.mxu0 0
        %807 = vmatprep.subr.bf16.mxu0 0
        %808 = vmatpush1.bf16.msra.mxu0 0
        %809 = vmatprep.subr.bf16.mxu0 0
        %810 = vmatpush1.bf16.msra.mxu0 0
        %811 = vmatprep.subr.bf16.mxu0 0
        %812 = vmatpush1.bf16.msra.mxu0 0
        %813 = vmatprep.mubr.bf16.mxu0 0
        %814 = vmatmul.mubr.bf16.gmra.mrb[0].mxu0 %v773
        %v815 = vpop.f32.mrb[0].mxu0
        %v816 = vadd.f32 0.0, %v815
        %v817 = vpop.f32.mrb[0].mxu0
        %v818 = vadd.f32 0.0, %v817
        %v819 = vpop.f32.mrb[0].mxu0
        %v820 = vpop.f32.mrb[0].mxu0
        %821 = vdwg.mxu0
        %v822 = vadd.f32 %v759, %v816
        %v823 = vadd.f32 %v760, %v818
        %824 = vrot.lane.b32.xlu0 %v376, 34
        %v825 = vpop.permute.xlu0 %824
        %v826 = vrot.slane %v825, 4
        %vm827 = vcmask 277504
        %v828 = vsel %vm827, %v826, %v825
        %vm829 = vcmp.ne.s16.totalorder %v828, 0
        %vm830 = vcmp.ne.s16.totalorder %v826, 0
        %v831 = vsel %vm829, %v233, 0
        %v832 = vsel %vm830, %v234, 0
        %s833 = scalar_lea.vmem %s2, 32
        %v834 = vld [vmem:[%s833] sm:$0xf]
        %v837 = vunpack.c.l.b16 %v831
        %v838 = vunpack.c.h.b16 %v831
        %v839 = vunpack.c.l.b16 %v832
        %v840 = vpack.c.b16 %v837, %v837
        %v841 = vpack.c.b16 %v838, %v838
        %v842 = vpack.c.b16 %v839, %v839
        %843 = vrot.lane.b32.xlu0 %v840, 94
        %v844 = vpop.permute.xlu0 %843
        %845 = vrot.lane.b32.xlu0 %v841, 94
        %v846 = vpop.permute.xlu0 %845
        %847 = vrot.lane.b32.xlu0 %v842, 94
        %v848 = vpop.permute.xlu0 %847
        %vm849 = vcmask 769024
        %v850 = vsel %vm849, %v844, %v846
        %v851 = vsel %vm849, %v846, %v848
        %v853 = vsel %vm254, %v834, 0
        %v856 = vsel %vm258, %v850, 0
        %v859 = vsel %vm258, %v851, 0
        %861 = vmatprep.subr.bf16.mxu0 %v859
        %862 = vmatpush1.bf16.msra.mxu0 %v856
        %863 = vmatprep.subr.bf16.mxu0 0
        %864 = vmatpush1.bf16.msra.mxu0 0
        %865 = vmatprep.subr.bf16.mxu0 0
        %866 = vmatpush1.bf16.msra.mxu0 0
        %867 = vmatprep.subr.bf16.mxu0 0
        %868 = vmatpush1.bf16.msra.mxu0 0
        %869 = vmatprep.subr.bf16.mxu0 0
        %870 = vmatpush1.bf16.msra.mxu0 0
        %871 = vmatprep.subr.bf16.mxu0 0
        %872 = vmatpush1.bf16.msra.mxu0 0
        %873 = vmatprep.subr.bf16.mxu0 0
        %874 = vmatpush1.bf16.msra.mxu0 0
        %875 = vmatprep.subr.bf16.mxu0 0
        %876 = vmatpush1.bf16.msra.mxu0 0
        %877 = vmatprep.subr.bf16.mxu0 0
        %878 = vmatpush1.bf16.msra.mxu0 0
        %879 = vmatprep.subr.bf16.mxu0 0
        %880 = vmatpush1.bf16.msra.mxu0 0
        %881 = vmatprep.subr.bf16.mxu0 0
        %882 = vmatpush1.bf16.msra.mxu0 0
        %883 = vmatprep.subr.bf16.mxu0 0
        %884 = vmatpush1.bf16.msra.mxu0 0
        %885 = vmatprep.subr.bf16.mxu0 0
        %886 = vmatpush1.bf16.msra.mxu0 0
        %887 = vmatprep.subr.bf16.mxu0 0
        %888 = vmatpush1.bf16.msra.mxu0 0
        %889 = vmatprep.subr.bf16.mxu0 0
        %890 = vmatpush1.bf16.msra.mxu0 0
        %891 = vmatprep.subr.bf16.mxu0 0
        %892 = vmatpush1.bf16.msra.mxu0 0
        %893 = vmatprep.mubr.bf16.mxu0 0
        %894 = vmatmul.mubr.bf16.gmra.mrb[0].mxu0 %v853
        %v895 = vpop.f32.mrb[0].mxu0
        %v896 = vadd.f32 0.0, %v895
        %v897 = vpop.f32.mrb[0].mxu0
        %v898 = vadd.f32 0.0, %v897
        %v899 = vpop.f32.mrb[0].mxu0
        %v900 = vpop.f32.mrb[0].mxu0
        %901 = vdwg.mxu0
        %v902 = vadd.f32 %v822, %v896
        %v903 = vadd.f32 %v823, %v898
        %s904 = smul.u32 %s17, 2
        %s905 = smul.addr %s904, 8
        %s906 = scalar_lea.vmem [#allocation2], %s905
        %907 = vst [vmem:[%s906] sm:$0xff] %v902
        %908 = vst [vmem:[%s906 + $0x8] sm:$0xff] %v903
        %p909 = scmp.eq.s32.totalorder %s17, 1
        // Predicated region
        $region41: #{tpu_custom_call.1} parent=39 // pred_check
          %p910 = pneg %p909
        $region42: #{tpu_custom_call.1} parent=39 // pred_check_branch
          %912 = sbr.rel (%p910) target = $region44
        $region43: #{tpu_custom_call.1} parent=39 // pred_region
          %v913 = vld [vmem:[#allocation2] sm:$0xff]
          %v914 = vld [vmem:[#allocation2 + $0x8] sm:$0xff]
          %v915 = vld [vmem:[#allocation2 + $0x10] sm:$0xff]
          %v916 = vld [vmem:[#allocation2 + $0x18] sm:$0xff]
          %v917 = vadd.f32 %v913, %v914
          %918 = vadd.xlane.f32.xlu0 %v917
          %v919 = vpop.xlane.xlu0 %918
          %v920 = vadd.f32 %v915, %v916
          %921 = vadd.xlane.f32.xlu0 %v920
          %v922 = vpop.xlane.xlu0 %921
          %v923 = vadd.f32 %v919, %v922
          %v924 = vmul.f32 %v923, 0.001953125
          %v925 = vsub.f32 %v913, %v924
          %v926 = vsub.f32 %v914, %v924
          %v927 = vsub.f32 %v915, %v924
          %v928 = vsub.f32 %v916, %v924
          %v929 = vmul.f32 %v925, %v925
          %v930 = vmul.f32 %v926, %v926
          %v931 = vmul.f32 %v927, %v927
          %v932 = vmul.f32 %v928, %v928
          %v933 = vadd.f32 %v929, %v930
          %934 = vadd.xlane.f32.xlu0 %v933
          %v935 = vpop.xlane.xlu0 %934
          %v936 = vadd.f32 %v931, %v932
          %937 = vadd.xlane.f32.xlu0 %v936
          %v938 = vpop.xlane.xlu0 %937
          %v939 = vadd.f32 %v935, %v938
          %v940 = vmul.f32 %v939, 0.001953125
          %v941 = vld [vmem:[%s3] sm:$0xff]
          %v942 = vadd.f32 %v940, 1e-05
          %v943 = vrsqrt.pop %v942
          %v944 = vmul.f32 %v941, %v943
          %v945 = vld [vmem:[%s4] sm:$0xff]
          %v946 = vmul.f32 %v944, %v924
          %v947 = vsub.f32 %v945, %v946
          %949 = vset.pattern.permute.xlu0 0
          %950 = vperm.xlu0 %949, %v944
          %v951 = vpop.permute.xlu0 %950
          %v953 = vmul.f32 %v913, %v951
          %v954 = vmul.f32 %v914, %v951
          %v955 = vmul.f32 %v915, %v951
          %v956 = vmul.f32 %v916, %v951
          %958 = vset.pattern.permute.xlu0 0
          %959 = vperm.xlu0 %958, %v947
          %v960 = vpop.permute.xlu0 %959
          %v962 = vadd.f32 %v953, %v960
          %v963 = vadd.f32 %v954, %v960
          %v964 = vadd.f32 %v955, %v960
          %v965 = vadd.f32 %v956, %v960
          %vm966 = vcmp.ge.f32.partialorder %v962, 0.0
          %vm967 = vcmp.ge.f32.partialorder %v963, 0.0
          %vm968 = vcmp.ge.f32.partialorder %v964, 0.0
          %vm969 = vcmp.ge.f32.partialorder %v965, 0.0
          %v970 = vmul.f32 %v962, 0.01
          %v971 = vmul.f32 %v963, 0.01
          %v972 = vmul.f32 %v964, 0.01
          %v973 = vmul.f32 %v965, 0.01
          %v974 = vsel %vm966, %v962, %v970
          %v975 = vsel %vm967, %v963, %v971
          %v976 = vsel %vm968, %v964, %v972
          %v977 = vsel %vm969, %v965, %v973
          %978 = vst [vmem:[#allocation2] sm:$0xff] %v974
          %979 = vst [vmem:[#allocation2 + $0x8] sm:$0xff] %v975
          %980 = vst [vmem:[#allocation2 + $0x10] sm:$0xff] %v976
          %981 = vst [vmem:[#allocation2 + $0x18] sm:$0xff] %v977
        $region44: #{tpu_custom_call.1} parent=39 // pred_fallthru
          _
        // Predicated region
        $region45: #{tpu_custom_call.1} parent=39 // pred_check
          %p982 = pneg %p140
        $region46: #{tpu_custom_call.1} parent=39 // pred_check_branch
          %984 = sbr.rel (%p982) target = $region48
        $region47: #{tpu_custom_call.1} parent=39 // pred_region
          %s986 = ssub.s32 512, 512
          %987 = vsyncadd [#allocation3], %s986
          %s988 = sshll.u32 [#allocation2], 4
          %s989 = int_to_ptr.vmem [resolvable:$true] %s988
          %994 = dma.vmem_to_hbm [thread:$0]  %s989, 512, %s5, [#allocation3], 256, 256, 16
        $region48: #{tpu_custom_call.1} parent=39 // pred_fallthru
          _
        // Predicated region
        $region49: #{tpu_custom_call.1} parent=39 // pred_check
          %p995 = pneg %p140
        $region50: #{tpu_custom_call.1} parent=39 // pred_check_branch
          %997 = sbr.rel (%p995) target = $region52
        $region51: #{tpu_custom_call.1} parent=39 // pred_region
          %998 = dma.done [#allocation3], 512
        $region52: #{tpu_custom_call.1} parent=39 // pred_fallthru
          _
      $region40: #{tpu_custom_call.1} parent=5 // pred_fallthru
        _
      %p999 = scmp.le.s32.totalorder 2, %s12
      // Predicated region
      $region53: #{tpu_custom_call.1} parent=5 // pred_check
        %p1000 = pneg %p999
      $region54: #{tpu_custom_call.1} parent=5 // pred_check_branch
        %1002 = sbr.rel (%p1000) target = $region56
      $region55: #{tpu_custom_call.1} parent=5 // pred_region
        %s1003 = ssub.s32 %s12, 2
      $region56: #{tpu_custom_call.1} parent=5 // pred_fallthru
        _
    $region6: #{tpu_custom_call.1} parent=1 // loop_footer
      %s16 = sadd.s32 1, %s12
    $region7: #{tpu_custom_call.1} parent=1 // loop_footer_branch
      %11 = sbr.rel target = $region3
    $region8: #{tpu_custom_call.1} parent=1 // loop_exit
      _
    %1004 = vsyncpa [#allocation3], 1
    %s1005 = scalar_lea.sflag [#allocation3], 1
    %1006 = vsyncpa %s1005, 1

</llo_original>
